<compile_context>
chip_gen: v5e
topology: v5e:2x2
jax: 0.10.0
libtpu: 0.0.40
codegen_flags: <defaults>
</compile_context>

<pallas_src>
import jax
import jax.numpy as jnp
from jax.experimental import pallas as pl
from jax.experimental.pallas import tpu as pltpu


LANE = 128                      # TPU vreg lane width
_TARGET_TILE_BYTES = 4 << 20    # ~4 MiB per tile: >=85% of HBM roofline measured
_MAX_TILE_BYTES = 8 << 20       # hard cap per buffer (4x this double-buffered = 32 MiB)
_VMEM_LIMIT_BYTES = 40 << 20    # safe on v5e/v6e (128 MiB phys) and v7x (64 MiB phys)
_MIN_GRID_STEPS = 8             # even split across v7x's 2 TCs + pipeline depth


# ---------------------------------------------------------------------------
# Deterministic parameter construction mirroring MaskedLinear.__init__
# (random_mask=False, is_output=False). Unused by forward() per the reference.
# ---------------------------------------------------------------------------
def _get_input_degrees(in_features):
    """Degrees an input to MADE should have: [1, 2, ..., in_features]."""
    return jnp.arange(1, in_features + 1, dtype=jnp.int32)


def _masked_linear_params(key, in_degrees, out_features, autoregressive_features):
    in_features = in_degrees.shape[0]
    max_ = max(1, autoregressive_features - 1)
    min_ = min(1, autoregressive_features - 1)
    out_degrees = jnp.arange(out_features, dtype=jnp.int32) % max_ + min_
    mask = (out_degrees[:, None] >= in_degrees[None, :]).astype(jnp.float32)

    k_w, k_b = jax.random.split(key)
    bound = 1.0 / (in_features ** 0.5)
    weight = jax.random.uniform(
        k_w, (out_features, in_features), jnp.float32, minval=-bound, maxval=bound
    )
    bias = jax.random.uniform(
        k_b, (out_features,), jnp.float32, minval=-bound, maxval=bound
    )
    return weight, bias, mask, out_degrees


# ---------------------------------------------------------------------------
# Pallas kernel: elementwise activation (cos) on a lane-dense 2-D tile.
# cos lowers to VPU range-reduction + polynomial; the kernel is HBM-bandwidth
# bound at any realistic size, so the body stays minimal.
# ---------------------------------------------------------------------------
def _cos_kernel(x_ref, o_ref):
    o_ref[...] = jnp.cos(x_ref[...])


def _sublane_multiple(dtype):
    """Sublane alignment for packed dtypes: 8 (f32), 16 (bf16), 32 (int8/fp8)."""
    return max(8, 32 // jnp.dtype(dtype).itemsize)


def _choose_row_tile(rows, row_bytes, sub):
    """Row-tile for a (rows, C) slab whose last dim C stays fixed (lane-dense)."""
    if rows <= sub:
        return rows                                   # single full-extent block

    def floor_sub(v):
        return max(sub, (v // sub) * sub)

    cap = floor_sub(_MAX_TILE_BYTES // max(1, row_bytes))
    tgt = floor_sub(_TARGET_TILE_BYTES // max(1, row_bytes))
    # Aim for >= _MIN_GRID_STEPS steps (even across v7x's 2 cores, pipeline depth).
    grid_tile = -(-rows // _MIN_GRID_STEPS)
    grid_tile = max(sub, -(-grid_tile // sub) * sub)
    tile = min(cap, tgt, grid_tile, floor_sub(rows))
    return max(sub, tile)


def _cos_pallas_2d(x2, *, alias_input):
    """Run the cos kernel over a (rows, cols) array with cols % 128 == 0."""
    rows, cols = x2.shape
    itemsize = jnp.dtype(x2.dtype).itemsize
    sub = _sublane_multiple(x2.dtype)
    tile_rows = _choose_row_tile(rows, cols * itemsize, sub)
    grid = (-(-rows // tile_rows),)
    n_bytes = rows * cols * itemsize

    extra = {}
    if alias_input:
        extra["input_output_aliases"] = {0: 0}   # in-place: no 2nd HBM buffer

    return pl.pallas_call(
        _cos_kernel,
        out_shape=jax.ShapeDtypeStruct((rows, cols), x2.dtype),
        grid=grid,
        in_specs=[pl.BlockSpec((tile_rows, cols), lambda i: (i, 0))],
        out_specs=pl.BlockSpec((tile_rows, cols), lambda i: (i, 0)),
        compiler_params=pltpu.CompilerParams(
            dimension_semantics=("parallel",),
            vmem_limit_bytes=_VMEM_LIMIT_BYTES,
        ),
        cost_estimate=pl.CostEstimate(
            flops=rows * cols,
            transcendentals=0,              # cos is a VPU polynomial, not EUP
            bytes_accessed=2 * n_bytes,
        ),
        **extra,
    )(x2)


def masked_soft_feedforward_block_forward(x, *, min_pallas_elements=16384):
    """Forward pass of MaskedSoftFeedforwardBlock (default config):
    outputs = cos(inputs). x: any-shape float array (reference uses (batch, features))."""
    n = x.size
    if x.ndim == 0 or n == 0 or n < min_pallas_elements:
        # Tiny input: a pallas custom-call is pure overhead and blocks XLA fusion.
        return jnp.cos(x)

    itemsize = jnp.dtype(x.dtype).itemsize
    sub = _sublane_multiple(x.dtype)
    last = x.shape[-1]

    # ---- Fast path: trailing dim already lane-dense (multiple of 128). -----
    # Only collapse leading dims (layout-preserving); no pad / relayout copies.
    if last % LANE == 0 and last * itemsize * sub <= _MAX_TILE_BYTES:
        rows = n // last
        x2 = x.reshape(rows, last)
        # No input_output_aliases: aliasing the caller's array without donation
        # would make XLA insert a defensive copy (the round trip we're avoiding).
        out2 = _cos_pallas_2d(x2, alias_input=False)
        return out2.reshape(x.shape)

    # ---- Fallback: non-lane-aligned last dim -> flatten + pad to a slab. ---
    cols = LANE
    for c in (1024, 512, 256):           # wide tiles help v5e's single vst slot
        if n >= c * sub:
            cols = c
            break
    rows = -(-n // cols)
    rows = max(sub, -(-rows // sub) * sub)
    padded_n = rows * cols

    flat = x.reshape(-1)
    if padded_n != n:
        flat = jnp.pad(flat, (0, padded_n - n))
    x2 = flat.reshape(rows, cols)
    # x2 is a wrapper-internal temporary -> safe/profitable to alias in place.
    out2 = _cos_pallas_2d(x2, alias_input=True)
    return out2.reshape(-1)[:n].reshape(x.shape)


if __name__ == "__main__":
    key = jax.random.PRNGKey(0)
    k_param, k_x1, k_x2, k_x3 = jax.random.split(key, 4)

    # Module-scale shapes: inputs are (batch, features).
    batch = 8
    features = 32                      # len(in_degrees)
    autoregressive_features = 32

    in_degrees = _get_input_degrees(features)
    # Constructed deterministically as the module's __init__ would, but the
    # reference forward() never applies the masked linear layer / dropout.
    weight, bias, mask, degrees = _masked_linear_params(
        k_param, in_degrees, features, autoregressive_features
    )
    # TODO(synk): context_features / use_batch_norm paths raise / are disabled
    # by default in the reference; only the default forward path is implemented.

    # 1) Small module-sized input: force the Pallas path (min_pallas_elements=0)
    #    so the padded-fallback kernel is exercised (32 features -> pad to 128).
    x_small = jax.random.normal(k_x1, (batch, features), dtype=jnp.float32)
    out_small = masked_soft_feedforward_block_forward(x_small, min_pallas_elements=0)
    out_small = jax.block_until_ready(out_small)
    assert out_small.shape == x_small.shape and out_small.dtype == x_small.dtype
    assert jnp.allclose(out_small, jnp.cos(x_small), atol=1e-6, rtol=1e-6)

    # 2) bf16 input with lane-dense last dim: exercises the native-shape fast
    #    path with dtype-aware (16-sublane) tiling. Grid = (8,) parallel steps.
    x_bf16 = jax.random.normal(k_x3, (512, 256), dtype=jnp.bfloat16)
    out_bf16 = masked_soft_feedforward_block_forward(x_bf16, min_pallas_elements=0)
    out_bf16 = jax.block_until_ready(out_bf16)
    assert out_bf16.shape == x_bf16.shape and out_bf16.dtype == x_bf16.dtype
    assert jnp.allclose(out_bf16.astype(jnp.float32),
                        jnp.cos(x_bf16).astype(jnp.float32),
                        atol=2e-2, rtol=2e-2)

    # 3) Larger f32 batch with last dim a multiple of 128: native-shape fast
    #    path (no reshape/pad), grid of 8 x (256, 384) tiles, double-buffered.
    x_large = jax.random.normal(k_x2, (2048, 384), dtype=jnp.float32)
    out_large = masked_soft_feedforward_block_forward(x_large)
    out_large = jax.block_until_ready(out_large)
    assert out_large.shape == x_large.shape and out_large.dtype == x_large.dtype
    assert jnp.allclose(out_large, jnp.cos(x_large), atol=1e-6, rtol=1e-6)

    print("KERNEL_OK")
</pallas_src>

<mosaic_0001>
module attributes {stable_mosaic.version = 11 : i64} {
  func.func @_cos_kernel(%arg0: i32, %arg1: memref<8x128xf32, #tpu.memory_space<vmem>>, %arg2: memref<8x128xf32, #tpu.memory_space<vmem>>) attributes {dimension_semantics = [#tpu.dimension_semantics<parallel>], iteration_bounds = array<i64: 1>, scalar_prefetch = 0 : i64, scratch_operands = 0 : i64, tpu.core_type = #tpu.core_type<tc>, window_params = [{transform_indices = @transform_0, window_bounds = array<i64: 8, 128>}, {transform_indices = @transform_1, window_bounds = array<i64: 8, 128>}]} {
    %c0 = arith.constant 0 : index
    %c0_0 = arith.constant 0 : index
    %0 = vector.load %arg1[%c0, %c0_0] : memref<8x128xf32, #tpu.memory_space<vmem>>, vector<8x128xf32>
    %1 = math.cos %0 : vector<8x128xf32>
    %c0_1 = arith.constant 0 : index
    %c0_2 = arith.constant 0 : index
    %2 = vector.load %arg2[%c0_1, %c0_2] : memref<8x128xf32, #tpu.memory_space<vmem>>, vector<8x128xf32>
    tpu.vector_store %arg2[%c0_1, %c0_2], %1 {strides = array<i32>} : memref<8x128xf32, #tpu.memory_space<vmem>>, vector<8x128xf32>,
    return
  }
  func.func @transform_0(%arg0: i32) -> (i32, i32) {
    %c0_i32 = arith.constant 0 : i32
    %c0_i32_0 = arith.constant 0 : i32
    return %arg0, %c0_i32 : i32, i32
  }
  func.func @transform_1(%arg0: i32) -> (i32, i32) {
    %c0_i32 = arith.constant 0 : i32
    %c0_i32_0 = arith.constant 0 : i32
    return %arg0, %c0_i32 : i32, i32
  }
}

</mosaic_0001>

<llo_original>
// kernel: tpu_custom_call.1
$region0: #{tpu_custom_call.1}
  #allocation0 [shape = 'u32[]', space=smem, size = 0x4, offset = 0x4, fixed_abs, tag = 'smem constant byte address 0x4 - core index']
  #allocation1 [shape = 'u32[72,128]{1,0:T(1,128)}', space=vmem, size = 0x9000, scoped, tag = 'internal scratch']
  %s0 = inlined_call_operand.hbm [shape: f32[8,128], index: 0, kind: input, shape index: {}, may-alias: {0,1}]
  %s1 = inlined_call_operand.hbm [shape: f32[8,128], index: 1, kind: output, shape index: {}, may-alias: {0,1}]
  %s2 = sld [smem:[#allocation0]]
  $region18: #{tpu_custom_call.1} parent=0
    _
  %s4 = ssub.s32 1, %s2
  %s5 = scalar_select 0, %s4, %s2
  $region1: #{tpu_custom_call.1} parent=0
    #allocation2 [shape = 'u8[4096]{0}', space=vmem, size = 0x1000, scoped, tag = 'input window, operand 0, single buffered']
    #allocation3 [shape = 's32[1]{0}', space=sflag, size = 0x4, scoped, tag = 'scoped memory for tpu_custom_call.1']
    #allocation4 [shape = 's32[1]{0}', space=sflag, size = 0x4, scoped, tag = 'scoped memory for tpu_custom_call.1']
    #allocation5 [shape = 'u8[4096]{0}', space=vmem, size = 0x1000, scoped, tag = 'output window, operand 0, single buffered']
    %6 = vsyncpa [#allocation3], 0
    %7 = vsyncpa [#allocation4], 0
    // Predicated region
    $region2: #{tpu_custom_call.1} parent=1 // pred_check
      _
    $region3: #{tpu_custom_call.1} parent=1 // pred_check_branch
      %9 = sbr.rel (0) target = $region5
    $region4: #{tpu_custom_call.1} parent=1 // pred_region
      %11 = vsyncadd [#allocation3], 0
      %s13 = sshll.u32 %s0, 4
      %s14 = int_to_ptr.hbm [resolvable:$true] %s13
      %s15 = sshll.u32 [#allocation2], 4
      %s16 = int_to_ptr.vmem [resolvable:$true] %s15
      %18 = dma.hbm_to_vmem [thread:$0]  %s14, 128, %s16, [#allocation3]
    $region5: #{tpu_custom_call.1} parent=1 // pred_fallthru
      _
    // Predicated region
    $region6: #{tpu_custom_call.1} parent=1 // pred_check
      _
    $region7: #{tpu_custom_call.1} parent=1 // pred_check_branch
      %20 = sbr.rel (0) target = $region9
    $region8: #{tpu_custom_call.1} parent=1 // pred_region
      %22 = dma.done [#allocation3], 128
    $region9: #{tpu_custom_call.1} parent=1 // pred_fallthru
      _
    %v23 = vld [vmem:[#allocation2] sm:$0xff]
    %v24 = vand.u32 2147483647, %v23
    %vm25 = vcmp.le.f32.partialorder %v24, 0.7853982
    %vm26 = vcmp.lt.s32.totalorder %v23, 0
    %v27 = vand.u32 %v23, 2139095040
    %v28 = vshrl.u32 %v27, 23
    %v29 = vsub.s32 %v28, 127
    %v30 = vand.u32 2147483647, %v23
    %v31 = vand.u32 %v30, 8388607
    %v32 = vor.u32 %v31, 8388608
    %v33 = vsub.s32 0, %v32
    %v34 = vadd.s32 %v29, 1
    %vm35 = vcmp.gt.s32.totalorder %v34, 0
    %v36 = vsel %vm35, %v34, 0
    %v37 = vshrl.u32 %v36, 5
    %v38 = vand.u32 %v36, 31
    %v39 = vsub.s32 32, %v38
    %v40 = vshrl.u32 683565275, %v39
    %v41 = vshll.u32 683565275, %v38
    %v42 = vshrl.u32 2475754826, %v39
    %v43 = vor.u32 %v41, %v42
    %v44 = vshll.u32 2475754826, %v38
    %v45 = vshrl.u32 2131351028, %v39
    %v46 = vor.u32 %v44, %v45
    %v47 = vshll.u32 2131351028, %v38
    %v48 = vshrl.u32 2102212464, %v39
    %v49 = vor.u32 %v47, %v48
    %v50 = vshll.u32 2102212464, %v38
    %v51 = vshrl.u32 920167782, %v39
    %v52 = vor.u32 %v50, %v51
    %v53 = vshll.u32 920167782, %v38
    %v54 = vshrl.u32 1326507024, %v39
    %v55 = vor.u32 %v53, %v54
    %vm56 = vcmp.lt.s32.totalorder %v37, 1
    %vm57 = vcmp.lt.s32.totalorder %v37, 2
    %vm58 = vcmp.lt.s32.totalorder %v37, 3
    %vm59 = vcmp.lt.s32.totalorder %v37, 4
    %v60 = vsel %vm56, %v40, %v43
    %v61 = vsel %vm59, %v49, 2102212464
    %v62 = vsel %vm58, %v46, %v61
    %v63 = vsel %vm57, %v60, %v62
    %v64 = vsel %vm56, %v43, %v46
    %v65 = vsel %vm59, %v52, 920167782
    %v66 = vsel %vm58, %v49, %v65
    %v67 = vsel %vm57, %v64, %v66
    %v68 = vsel %vm56, %v46, %v49
    %v69 = vsel %vm59, %v55, 1326507024
    %v70 = vsel %vm58, %v52, %v69
    %v71 = vsel %vm57, %v68, %v70
    %v72 = vshll.u32 %v32, 8
    %v73 = vand.u32 %v72, 65535
    %v74 = vshrl.u32 %v72, 16
    %v75 = vand.u32 %v71, 65535
    %v76 = vshrl.u32 %v71, 16
    %v77 = vmul.u32 %v73, %v75
    %v78 = vmul.u32 %v73, %v76
    %v79 = vmul.u32 %v74, %v75
    %v80 = vmul.u32 %v74, %v76
    %v81 = vshll.u32 %v78, 16
    %v82 = vshrl.u32 %v78, 16
    %v83 = vshll.u32 %v79, 16
    %v84 = vshrl.u32 %v79, 16
    %vm85 = vc.u32 %v77, %v81
    %v86 = vsel %vm85, 1, 0
    %v87 = vadd.s32 %v77, %v81
    %v88 = vadd.s32 %v80, %v86
    %vm89 = vc.u32 %v87, %v83
    %v90 = vsel %vm89, 1, 0
    %v91 = vadd.s32 %v87, %v83
    %v92 = vadd.s32 %v88, %v90
    %v93 = vadd.s32 %v92, %v82
    %v94 = vadd.s32 %v93, %v84
    %v95 = vand.u32 %v72, 65535
    %v96 = vshrl.u32 %v72, 16
    %v97 = vand.u32 %v67, 65535
    %v98 = vshrl.u32 %v67, 16
    %v99 = vmul.u32 %v95, %v97
    %v100 = vmul.u32 %v95, %v98
    %v101 = vmul.u32 %v96, %v97
    %v102 = vmul.u32 %v96, %v98
    %v103 = vshll.u32 %v100, 16
    %v104 = vshrl.u32 %v100, 16
    %v105 = vshll.u32 %v101, 16
    %v106 = vshrl.u32 %v101, 16
    %vm107 = vc.u32 %v99, %v103
    %v108 = vsel %vm107, 1, 0
    %v109 = vadd.s32 %v99, %v103
    %v110 = vadd.s32 %v102, %v108
    %vm111 = vc.u32 %v109, %v105
    %v112 = vsel %vm111, 1, 0
    %v113 = vadd.s32 %v109, %v105
    %v114 = vadd.s32 %v110, %v112
    %v115 = vadd.s32 %v114, %v104
    %v116 = vadd.s32 %v115, %v106
    %v117 = vmul.u32 %v72, %v63
    %v118 = vadd.s32 %v94, %v113
    %vm119 = vc.u32 %v94, %v113
    %v120 = vadd.s32 %v116, 1
    %v121 = vsel %vm119, %v120, %v116
    %v122 = vadd.s32 %v117, %v121
    %v123 = vadd.s32 %v122, 536870912
    %v124 = vshrl.u32 %v123, 30
    %v125 = vshll.u32 %v124, 30
    %v126 = vsub.s32 %v122, %v125
    %vm127 = vcmp.lt.s32.totalorder %v126, 0
    %v128 = vsub.s32 0, %v126
    %v129 = vsel %vm127, %v128, %v126
    %v130 = vclz %v129
    %v131 = vsub.s32 %v130, 2
    %vm132 = vcmp.gt.s32.totalorder 0, %v131
    %v133 = vsel %vm132, 0, %v131
    %v134 = vsub.s32 32, %v133
    %v135 = vshll.u32 %v126, %v133
    %v136 = vshrl.u32 %v118, %v134
    %v137 = vor.u32 %v135, %v136
    %v138 = vsub.s32 4294967266, %v133
    %v139 = vadd.s32 %v138, 127
    %v140 = vshll.u32 %v139, 23
    %v141 = vor.u32 4788187, %v140
    %v142 = vand.u32 2147483647, %v141
    %v144 = vcvt.s32.f32 %v137
    %v145 = vmul.f32 %v144, %v142
    %v146 = vxor.u32 %v145, 2147483648
    %v147 = vsel %vm26, %v146, %v145
    %v148 = vsub.s32 4, %v124
    %v149 = vsel %vm26, %v148, %v124
    %v150 = vsel %vm25, %v23, %v147
    %v151 = vsel %vm25, 0, %v149
    %v152 = vmul.f32 %v150, %v150
    %v153 = vmul.f32 %v152, -0.001358992
    %v154 = vadd.f32 %v153, 0.041655596
    %v155 = vmul.f32 %v152, %v154
    %v156 = vadd.f32 %v155, -0.4999988
    %v157 = vmul.f32 %v152, %v156
    %v158 = vadd.f32 1.0, %v157
    %v159 = vmul.f32 %v150, %v150
    %v160 = vmul.f32 %v159, -0.00019511016
    %v161 = vadd.f32 %v160, 0.008332121
    %v162 = vmul.f32 %v159, %v161
    %v163 = vadd.f32 %v162, -0.16666654
    %v164 = vmul.f32 %v159, %v163
    %v165 = vadd.f32 %v164, 1.0
    %v166 = vmul.f32 %v165, %v150
    %vm167 = vweird.f32 %v23
    %v168 = vand.u32 %v151, 3
    %vm169 = vcmp.lt.s32.totalorder %v168, 2
    %vm170 = vcmp.eq.s32.totalorder %v168, 0
    %v171 = vxor.u32 %v166, 2147483648
    %v172 = vsel %vm170, %v158, %v171
    %vm173 = vcmp.eq.s32.totalorder %v168, 2
    %v174 = vxor.u32 %v158, 2147483648
    %v175 = vsel %vm173, %v174, %v166
    %v176 = vsel %vm169, %v172, %v175
    %v177 = vsel %vm167, nan, %v176
    %178 = vst [vmem:[#allocation5] sm:$0xff] %v177
    // Predicated region
    $region10: #{tpu_custom_call.1} parent=1 // pred_check
      _
    $region11: #{tpu_custom_call.1} parent=1 // pred_check_branch
      %180 = sbr.rel (0) target = $region13
    $region12: #{tpu_custom_call.1} parent=1 // pred_region
      %182 = vsyncadd [#allocation4], 0
      %s184 = sshll.u32 [#allocation5], 4
      %s185 = int_to_ptr.vmem [resolvable:$true] %s184
      %s186 = sshll.u32 %s1, 4
      %s187 = int_to_ptr.hbm [resolvable:$true] %s186
      %189 = dma.vmem_to_hbm [thread:$0]  %s185, 128, %s187, [#allocation4]
    $region13: #{tpu_custom_call.1} parent=1 // pred_fallthru
      _
    // Predicated region
    $region14: #{tpu_custom_call.1} parent=1 // pred_check
      _
    $region15: #{tpu_custom_call.1} parent=1 // pred_check_branch
      %191 = sbr.rel (0) target = $region17
    $region16: #{tpu_custom_call.1} parent=1 // pred_region
      %193 = dma.done [#allocation4], 128
    $region17: #{tpu_custom_call.1} parent=1 // pred_fallthru
      _
    %194 = vsyncpa [#allocation3], 1
    %195 = vsyncpa [#allocation4], 1

</llo_original>
